<compile_context>
chip_gen: v6e
topology: v6e:2x2x1
jax: 0.10.0
libtpu: 0.0.40
codegen_flags: <defaults>
</compile_context>

<pallas_src>
import jax
import jax.numpy as jnp
from jax import lax
from jax.experimental import pallas as pl
from jax.experimental.pallas import tpu as pltpu

EPS = 1e-5


def _ln_fused_transpose_kernel(x_ref, gamma_ref, beta_ref, o_ref):
    # x_ref:     (1, C, T) block  -- channels on sublanes, tokens on lanes.
    # gamma_ref: (C, 1), beta_ref: (C, 1)
    # o_ref:     (1, T, C) block of the (B, HW, C) output.
    x = x_ref[0].astype(jnp.float32)                    # (C, T), lane-dense
    mean = jnp.mean(x, axis=0, keepdims=True)           # (1, T) sublane reduce
    xc = x - mean
    var = jnp.mean(xc * xc, axis=0, keepdims=True)      # (1, T)
    inv = lax.rsqrt(var + EPS)
    g = gamma_ref[...].astype(jnp.float32)              # (C, 1)
    b = beta_ref[...].astype(jnp.float32)               # (C, 1)
    y = xc * inv * g + b                                # (C, T)
    # Single in-VMEM transpose (XLU) right before the store.
    o_ref[0] = jnp.transpose(y).astype(o_ref.dtype)     # (T, C)


def _choose_tile_hw(HW, C, itemsize):
    """Largest lane-aligned token tile that divides HW and fits scoped VMEM."""
    if HW % 128 != 0:
        # Full-extent block per image (block dim == array dim is allowed).
        return HW
    # Keep (double-buffered in + out + f32 staging) * tile well under the
    # v5e 16 MiB scoped-VMEM default even for large embed dims.
    budget_bytes = 2 * 1024 * 1024                       # per (C, tile) buffer
    cap = budget_bytes // max(1, C * max(itemsize, 4))
    cap = max(128, min(HW, 4096, (cap // 128) * 128))
    t = cap
    while HW % t != 0:
        t -= 128
    return t


def patch_embed_forward(x, gamma=None, beta=None):
    """x: (B, C, H, W) NCHW.  Returns (B, H*W, C) = norm(x.flatten(2).transpose(1, 2))."""
    B, C, H, W = x.shape
    HW = H * W
    x3 = x.reshape(B, C, HW)                             # free reshape, no HBM pass

    if gamma is None:
        # norm_layer=None: forward is only the flatten + transpose.
        return jnp.transpose(x3, (0, 2, 1))

    gamma_col = gamma.reshape(C, 1)
    beta_col = beta.reshape(C, 1)

    itemsize = jnp.dtype(x.dtype).itemsize
    tile_hw = _choose_tile_hw(HW, C, itemsize)
    grid = (B, HW // tile_hw)

    cost = pl.CostEstimate(
        flops=8 * B * HW * C,
        transcendentals=0,
        bytes_accessed=2 * B * HW * C * itemsize + 2 * C * 4,
    )

    out = pl.pallas_call(
        _ln_fused_transpose_kernel,
        out_shape=jax.ShapeDtypeStruct((B, HW, C), x.dtype),
        grid_spec=pltpu.PrefetchScalarGridSpec(
            num_scalar_prefetch=0,
            grid=grid,
            in_specs=[
                pl.BlockSpec((1, C, tile_hw), lambda b, i: (b, 0, i)),
                pl.BlockSpec((C, 1), lambda b, i: (0, 0)),
                pl.BlockSpec((C, 1), lambda b, i: (0, 0)),
            ],
            out_specs=pl.BlockSpec((1, tile_hw, C), lambda b, i: (b, i, 0)),
        ),
        compiler_params=pltpu.CompilerParams(
            dimension_semantics=("parallel", "parallel"),
            vmem_limit_bytes=32 * 1024 * 1024,
        ),
        cost_estimate=cost,
    )(x3, gamma_col, beta_col)

    return out


def patch_embed_reference(x, gamma, beta):
    B, C, H, W = x.shape
    xt = jnp.transpose(x.reshape(B, C, H * W), (0, 2, 1)).astype(jnp.float32)
    mean = jnp.mean(xt, axis=-1, keepdims=True)
    var = jnp.mean((xt - mean) ** 2, axis=-1, keepdims=True)
    y = (xt - mean) / jnp.sqrt(var + EPS) * gamma + beta
    return y.astype(x.dtype)


if __name__ == "__main__":
    # Module config (small): img_size=16, embed_dim=32, norm_layer=LayerNorm.
    # Forward input is (B, embed_dim, H, W).
    B, C, H, W = 2, 32, 16, 16

    key = jax.random.PRNGKey(0)
    kx, kg, kb = jax.random.split(key, 3)
    x = jax.random.normal(kx, (B, C, H, W), dtype=jnp.float32)
    # Deterministic LayerNorm params (nontrivial affine).
    gamma = 1.0 + 0.1 * jax.random.normal(kg, (C,), dtype=jnp.float32)
    beta = 0.1 * jax.random.normal(kb, (C,), dtype=jnp.float32)

    out = patch_embed_forward(x, gamma, beta)
    out = jax.block_until_ready(out)

    ref = patch_embed_reference(x, gamma, beta)
    assert out.shape == (B, H * W, C), out.shape
    assert jnp.allclose(out, ref, atol=1e-5, rtol=1e-5), "mismatch vs reference"

    # Also exercise the norm_layer=None path (pure flatten+transpose).
    out_nonorm = jax.block_until_ready(patch_embed_forward(x))
    assert out_nonorm.shape == (B, H * W, C)

    print("KERNEL_OK")
</pallas_src>

<mosaic_0001>
module attributes {stable_mosaic.version = 11 : i64} {
  func.func @_ln_fused_transpose_kernel(%arg0: i32, %arg1: i32, %arg2: memref<1x32x256xf32, #tpu.memory_space<vmem>>, %arg3: memref<32x1xf32, #tpu.memory_space<vmem>>, %arg4: memref<32x1xf32, #tpu.memory_space<vmem>>, %arg5: memref<1x256x32xf32, #tpu.memory_space<vmem>>) attributes {dimension_semantics = [#tpu.dimension_semantics<parallel>, #tpu.dimension_semantics<parallel>], iteration_bounds = array<i64: 2, 1>, scalar_prefetch = 0 : i64, scratch_operands = 0 : i64, tpu.core_type = #tpu.core_type<tc>, window_params = [{transform_indices = @transform_0, window_bounds = array<i64: 1, 32, 256>}, {pipeline_mode = #tpu.pipeline_mode<synchronous>, transform_indices = @transform_1, window_bounds = array<i64: 32, 1>}, {pipeline_mode = #tpu.pipeline_mode<synchronous>, transform_indices = @transform_2, window_bounds = array<i64: 32, 1>}, {transform_indices = @transform_3, window_bounds = array<i64: 1, 256, 32>}]} {
    %c0 = arith.constant 0 : index
    %c0_0 = arith.constant 0 : index
    %c0_1 = arith.constant 0 : index
    %0 = vector.load %arg2[%c0, %c0_0, %c0_1] : memref<1x32x256xf32, #tpu.memory_space<vmem>>, vector<1x32x256xf32>
    %1 = vector.shape_cast %0 : vector<1x32x256xf32> to vector<32x256xf32>
    %cst = arith.constant dense<0.000000e+00> : vector<256xf32>
    %2 = vector.multi_reduction <add>, %1, %cst [0] : vector<32x256xf32> to vector<256xf32>
    %3 = vector.shape_cast %2 : vector<256xf32> to vector<1x256xf32>
    %cst_2 = arith.constant 3.200000e+01 : f32
    %4 = vector.broadcast %cst_2 : f32 to vector<1x256xf32>
    %5 = arith.divf %3, %4 : vector<1x256xf32>
    %6 = vector.broadcast %5 : vector<1x256xf32> to vector<32x256xf32>
    %7 = arith.subf %1, %6 : vector<32x256xf32>
    %8 = arith.mulf %7, %7 : vector<32x256xf32>
    %cst_3 = arith.constant dense<0.000000e+00> : vector<256xf32>
    %9 = vector.multi_reduction <add>, %8, %cst_3 [0] : vector<32x256xf32> to vector<256xf32>
    %10 = vector.shape_cast %9 : vector<256xf32> to vector<1x256xf32>
    %cst_4 = arith.constant 3.200000e+01 : f32
    %11 = vector.broadcast %cst_4 : f32 to vector<1x256xf32>
    %12 = arith.divf %10, %11 : vector<1x256xf32>
    %cst_5 = arith.constant 9.99999974E-6 : f32
    %13 = vector.broadcast %cst_5 : f32 to vector<1x256xf32>
    %14 = arith.addf %12, %13 : vector<1x256xf32>
    %15 = math.rsqrt %14 : vector<1x256xf32>
    %c0_6 = arith.constant 0 : index
    %c0_7 = arith.constant 0 : index
    %16 = vector.load %arg3[%c0_6, %c0_7] : memref<32x1xf32, #tpu.memory_space<vmem>>, vector<32x1xf32>
    %c0_8 = arith.constant 0 : index
    %c0_9 = arith.constant 0 : index
    %17 = vector.load %arg4[%c0_8, %c0_9] : memref<32x1xf32, #tpu.memory_space<vmem>>, vector<32x1xf32>
    %18 = vector.broadcast %15 : vector<1x256xf32> to vector<32x256xf32>
    %19 = arith.mulf %7, %18 : vector<32x256xf32>
    %20 = vector.broadcast %16 : vector<32x1xf32> to vector<32x256xf32>
    %21 = arith.mulf %19, %20 : vector<32x256xf32>
    %22 = vector.broadcast %17 : vector<32x1xf32> to vector<32x256xf32>
    %23 = arith.addf %21, %22 : vector<32x256xf32>
    %24 = tpu.transpose %23, [1, 0] : vector<32x256xf32> -> vector<256x32xf32>
    %c0_10 = arith.constant 0 : index
    %c0_11 = arith.constant 0 : index
    %c0_12 = arith.constant 0 : index
    %25 = vector.load %arg5[%c0_10, %c0_11, %c0_12] : memref<1x256x32xf32, #tpu.memory_space<vmem>>, vector<1x256x32xf32>
    %26 = vector.shape_cast %25 : vector<1x256x32xf32> to vector<256x32xf32>
    %27 = vector.shape_cast %24 : vector<256x32xf32> to vector<1x256x32xf32>
    tpu.vector_store %arg5[%c0_10, %c0_11, %c0_12], %27 {strides = array<i32>} : memref<1x256x32xf32, #tpu.memory_space<vmem>>, vector<1x256x32xf32>,
    return
  }
  func.func @transform_0(%arg0: i32, %arg1: i32) -> (i32, i32, i32) {
    %c0_i32 = arith.constant 0 : i32
    %c0_i32_0 = arith.constant 0 : i32
    return %arg0, %c0_i32, %arg1 : i32, i32, i32
  }
  func.func @transform_1(%arg0: i32, %arg1: i32) -> (i32, i32) {
    %c0_i32 = arith.constant 0 : i32
    %c0_i32_0 = arith.constant 0 : i32
    %c0_i32_1 = arith.constant 0 : i32
    return %c0_i32, %c0_i32_0 : i32, i32
  }
  func.func @transform_2(%arg0: i32, %arg1: i32) -> (i32, i32) {
    %c0_i32 = arith.constant 0 : i32
    %c0_i32_0 = arith.constant 0 : i32
    %c0_i32_1 = arith.constant 0 : i32
    return %c0_i32, %c0_i32_0 : i32, i32
  }
  func.func @transform_3(%arg0: i32, %arg1: i32) -> (i32, i32, i32) {
    %c0_i32 = arith.constant 0 : i32
    %c0_i32_0 = arith.constant 0 : i32
    return %arg0, %arg1, %c0_i32 : i32, i32, i32
  }
}

</mosaic_0001>

<llo_original>
// kernel: tpu_custom_call.1
$region0: #{tpu_custom_call.1}
  #allocation0 [shape = 'u32[]', space=smem, size = 0x4, offset = 0x4, fixed_abs, tag = 'smem constant byte address 0x4 - core index']
  #allocation1 [shape = 'u32[144,128]{1,0:T(1,128)}', space=vmem, size = 0x12000, scoped, tag = 'internal scratch']
  %s0 = inlined_call_operand.hbm [shape: f32[2,32,256], index: 0, kind: input, shape index: {}]
  %s1 = inlined_call_operand.vmem [shape: f32[32,1], index: 1, kind: input, shape index: {}]
  %s2 = inlined_call_operand.vmem [shape: f32[32,1], index: 2, kind: input, shape index: {}]
  %s3 = inlined_call_operand.vmem [shape: f32[2,256,32], index: 3, kind: output, shape index: {}]
  %s4 = sld [smem:[#allocation0]]
  $region49: #{tpu_custom_call.1} parent=0
    _
  %s6 = ssub.s32 1, %s4
  %s7 = scalar_select 0, %s6, %s4
  $region1: #{tpu_custom_call.1} parent=0
    #allocation2 [shape = 'u8[65536]{0}', space=vmem, size = 0x10000, scoped, tag = 'input window, operand 0']
    #allocation3 [shape = 's32[2]{0}', space=sflag, size = 0x8, scoped, tag = 'scoped memory for tpu_custom_call.1']
    %8 = vsyncpa [#allocation3], 0
    %s9 = scalar_lea.sflag [#allocation3], 1
    %10 = vsyncpa %s9, 0
    loop: start=0, step=1, limit=4
    $region2: #{tpu_custom_call.1} parent=1 // loop_pre_header
      _
    $region3: #{tpu_custom_call.1} parent=1 // loop_header
      %s12 = sphi 0, %s16
      %p13 = scmp.ge.s32.totalorder %s12, 4
      %s19 = sphi 0, %s31
      %s20 = sphi 0, %s27
      %s21 = sphi 0, %s19
      %s22 = sphi 0, %s20
      %s23 = sphi 0, %s21
      %s24 = sphi 0, %s22
      %s36 = sphi 0, %s38
      %s39 = sphi 0, %s36
      %s40 = sphi 0, %s39
      %s56 = sphi 0, %s40
      %s60 = sphi 0, %s60
      %s62 = sphi 0, %s60
      %s63 = sphi 0, %s62
      %s77 = sphi 0, %s63
      %s81 = sphi 0, %s81
      %s83 = sphi 0, %s81
      %s84 = sphi 0, %s83
      %s98 = sphi 0, %s84
      %s106 = sphi 0, %s108
      %s109 = sphi 0, %s106
      %s110 = sphi 0, %s109
      %s126 = sphi 0, %s110
    $region4: #{tpu_custom_call.1} parent=1 // loop_header_branch
      %15 = sbr.rel (%p13) target = $region8
    $region5: #{tpu_custom_call.1} parent=1 // loop_body
      %s17 = ssub.s32 %s12, 1
      %s18 = ssub.s32 %s12, 2
      %s25 = sadd.s32 1, %s20
      %p26 = scmp.ge.s32.totalorder %s25, 1
      %s27 = scalar_select %p26, 0, %s25
      %s28 = sadd.s32 1, %s19
      %s29 = scalar_select %p26, %s28, %s19
      %p30 = scmp.ge.s32.totalorder %s29, 2
      %s31 = scalar_select %p30, 0, %s29
      %s32 = ssub.s32 %s19, %s31
      %s33 = ssub.s32 %s20, %s27
      %s34 = sor.u32 %s32, %s33
      %p35 = scmp.eq.s32.totalorder %s34, 0
      %s37 = sadd.s32 %s36, 1
      %s38 = scalar_select %p35, %s36, %s37
      %p41 = pneg %p35
      %p42 = scmp.eq.s32.totalorder %s12, 1
      %p43 = por %p41, %p42
      %p44 = scmp.ne.s32.totalorder %s36, %s39
      %p45 = scmp.eq.s32.totalorder %s12, 0
      %p46 = por %p44, %p45
      %p47 = scmp.ne.s32.totalorder %s36, %s39
      %p48 = scmp.eq.s32.totalorder %s17, 1
      %p49 = por %p47, %p48
      %p50 = scmp.ne.s32.totalorder %s39, %s40
      %p51 = scmp.eq.s32.totalorder %s17, 0
      %p52 = por %p50, %p51
      %p53 = scmp.ne.s32.totalorder %s39, %s40
      %p54 = scmp.eq.s32.totalorder %s18, 1
      %p55 = por %p53, %p54
      %p57 = scmp.ne.s32.totalorder %s40, %s56
      %p58 = scmp.eq.s32.totalorder %s18, 0
      %p59 = por %p57, %p58
      %s61 = sadd.s32 %s60, 1
      %p64 = scmp.eq.s32.totalorder %s12, 1
      %p65 = scmp.ne.s32.totalorder %s60, %s62
      %p66 = scmp.eq.s32.totalorder %s12, 0
      %p67 = por %p65, %p66
      %p68 = scmp.ne.s32.totalorder %s60, %s62
      %p69 = scmp.eq.s32.totalorder %s17, 1
      %p70 = por %p68, %p69
      %p71 = scmp.ne.s32.totalorder %s62, %s63
      %p72 = scmp.eq.s32.totalorder %s17, 0
      %p73 = por %p71, %p72
      %p74 = scmp.ne.s32.totalorder %s62, %s63
      %p75 = scmp.eq.s32.totalorder %s18, 1
      %p76 = por %p74, %p75
      %p78 = scmp.ne.s32.totalorder %s63, %s77
      %p79 = scmp.eq.s32.totalorder %s18, 0
      %p80 = por %p78, %p79
      %s82 = sadd.s32 %s81, 1
      %p85 = scmp.eq.s32.totalorder %s12, 1
      %p86 = scmp.ne.s32.totalorder %s81, %s83
      %p87 = scmp.eq.s32.totalorder %s12, 0
      %p88 = por %p86, %p87
      %p89 = scmp.ne.s32.totalorder %s81, %s83
      %p90 = scmp.eq.s32.totalorder %s17, 1
      %p91 = por %p89, %p90
      %p92 = scmp.ne.s32.totalorder %s83, %s84
      %p93 = scmp.eq.s32.totalorder %s17, 0
      %p94 = por %p92, %p93
      %p95 = scmp.ne.s32.totalorder %s83, %s84
      %p96 = scmp.eq.s32.totalorder %s18, 1
      %p97 = por %p95, %p96
      %p99 = scmp.ne.s32.totalorder %s84, %s98
      %p100 = scmp.eq.s32.totalorder %s18, 0
      %p101 = por %p99, %p100
      %s102 = ssub.s32 %s19, %s31
      %s103 = ssub.s32 %s20, %s27
      %s104 = sor.u32 %s102, %s103
      %p105 = scmp.eq.s32.totalorder %s104, 0
      %s107 = sadd.s32 %s106, 1
      %s108 = scalar_select %p105, %s106, %s107
      %p111 = pneg %p105
      %p112 = scmp.eq.s32.totalorder %s12, 1
      %p113 = por %p111, %p112
      %p114 = scmp.ne.s32.totalorder %s106, %s109
      %p115 = scmp.eq.s32.totalorder %s12, 0
      %p116 = por %p114, %p115
      %p117 = scmp.ne.s32.totalorder %s106, %s109
      %p118 = scmp.eq.s32.totalorder %s17, 1
      %p119 = por %p117, %p118
      %p120 = scmp.ne.s32.totalorder %s109, %s110
      %p121 = scmp.eq.s32.totalorder %s17, 0
      %p122 = por %p120, %p121
      %p123 = scmp.ne.s32.totalorder %s109, %s110
      %p124 = scmp.eq.s32.totalorder %s18, 1
      %p125 = por %p123, %p124
      %p127 = scmp.ne.s32.totalorder %s110, %s126
      %p128 = scmp.eq.s32.totalorder %s18, 0
      %p129 = por %p127, %p128
      %p130 = scmp.le.s32.totalorder 1, %s12
      %p131 = scmp.lt.s32.totalorder %s12, 3
      %p132 = pnand %p130, %p131
      %p133 = pneg %p132
      // Predicated region
      $region9: #{tpu_custom_call.1} parent=5 // pred_check
        _
      $region10: #{tpu_custom_call.1} parent=5 // pred_check_branch
        %135 = sbr.rel (%p132) target = $region12
      $region11: #{tpu_custom_call.1} parent=5 // pred_region
        %s136 = ssub.s32 %s12, 1
        // Predicated region
        $region13: #{tpu_custom_call.1} parent=11 // pred_check
          %p137 = pneg %p73
        $region14: #{tpu_custom_call.1} parent=11 // pred_check_branch
          %139 = sbr.rel (%p137) target = $region16
        $region15: #{tpu_custom_call.1} parent=11 // pred_region
          _
        $region16: #{tpu_custom_call.1} parent=11 // pred_fallthru
          _
        // Predicated region
        $region17: #{tpu_custom_call.1} parent=11 // pred_check
          %p140 = pneg %p94
        $region18: #{tpu_custom_call.1} parent=11 // pred_check_branch
          %142 = sbr.rel (%p140) target = $region20
        $region19: #{tpu_custom_call.1} parent=11 // pred_region
          _
        $region20: #{tpu_custom_call.1} parent=11 // pred_fallthru
          _
      $region12: #{tpu_custom_call.1} parent=5 // pred_fallthru
        _
      %p143 = scmp.lt.s32.totalorder %s12, 2
      // Predicated region
      $region21: #{tpu_custom_call.1} parent=5 // pred_check
        %p144 = pneg %p143
      $region22: #{tpu_custom_call.1} parent=5 // pred_check_branch
        %146 = sbr.rel (%p144) target = $region24
      $region23: #{tpu_custom_call.1} parent=5 // pred_region
        // Predicated region
        $region25: #{tpu_custom_call.1} parent=23 // pred_check
          %p147 = pneg %p46
        $region26: #{tpu_custom_call.1} parent=23 // pred_check_branch
          %149 = sbr.rel (%p147) target = $region28
        $region27: #{tpu_custom_call.1} parent=23 // pred_region
          %s150 = sand.u32 %s36, 1
          %s151 = scalar_lea.sflag [#allocation3], %s150
          %s152 = sand.u32 %s36, 1
          %s153 = smul.addr %s152, 64
          %s154 = scalar_lea.vmem [#allocation2], %s153
          %s155 = smul.u32 2, %s20
          %s157 = ssub.s32 1024, 1024
          %158 = vsyncadd %s151, %s157
          %s159 = smul.addr %s19, 8
          %s160 = sadd.s32 %s155, %s159
          %s161 = smul.addr %s160, 128
          %s162 = scalar_lea.hbm %s0, %s161
          %s163 = sshll.u32 %s154, 4
          %s164 = int_to_ptr.vmem [resolvable:$true] %s163
          %169 = dma.hbm_to_vmem [thread:$0]  %s162, 1024, %s164, %s151, 256, 256, 16
        $region28: #{tpu_custom_call.1} parent=23 // pred_fallthru
          _
      $region24: #{tpu_custom_call.1} parent=5 // pred_fallthru
        _
      %p170 = scmp.le.s32.totalorder 1, %s12
      %p171 = scmp.lt.s32.totalorder %s12, 3
      %p172 = pnand %p170, %p171
      %p173 = pneg %p172
      // Predicated region
      $region29: #{tpu_custom_call.1} parent=5 // pred_check
        _
      $region30: #{tpu_custom_call.1} parent=5 // pred_check_branch
        %175 = sbr.rel (%p172) target = $region32
      $region31: #{tpu_custom_call.1} parent=5 // pred_region
        %s176 = ssub.s32 %s12, 1
        %s177 = sand.u32 %s39, 1
        %s178 = scalar_lea.sflag [#allocation3], %s177
        %s179 = sand.u32 %s39, 1
        %s180 = smul.addr %s179, 64
        %s181 = scalar_lea.vmem [#allocation2], %s180
        // Predicated region
        $region33: #{tpu_custom_call.1} parent=31 // pred_check
          %p182 = pneg %p52
        $region34: #{tpu_custom_call.1} parent=31 // pred_check_branch
          %184 = sbr.rel (%p182) target = $region36
        $region35: #{tpu_custom_call.1} parent=31 // pred_region
          %185 = dma.done %s178, 1024
        $region36: #{tpu_custom_call.1} parent=31 // pred_fallthru
          _
        %s186 = sand.u32 %s39, 1
        %s187 = scalar_lea.sflag [#allocation3], %s186
        %s188 = sand.u32 %s39, 1
        %s189 = smul.addr %s188, 64
        %s190 = scalar_lea.vmem [#allocation2], %s189
        %p191 = pneg %p52
        %p192 = pneg %p49
        %p193 = pneg %p73
        %p194 = pneg %p70
        %p195 = pneg %p94
        %p196 = pneg %p91
        %p197 = pneg %p122
        %p198 = pneg %p119
        %s199 = smul.u32 32, %s22
        %p200 = scmp.lt.s32.totalorder %s21, 1
        %s201 = scalar_select %p200, %s21, 1
        %p202 = scmp.lt.s32.totalorder %s199, 31
        %s203 = scalar_select %p202, %s199, 31
        %s204 = smul.addr %s201, 32
        %s205 = sadd.s32 %s203, %s204
        %s206 = smul.addr %s205, 8
        %s207 = scalar_lea.vmem %s3, %s206
        %s208 = smul.u32 2, %s22
        %s209 = smul.u32 32, %s22
        %p210 = scmp.lt.s32.totalorder %s21, 1
        %s211 = scalar_select %p210, %s21, 1
        %p212 = scmp.lt.s32.totalorder %s209, 31
        %s213 = scalar_select %p212, %s209, 31
        %s214 = smul.addr %s211, 32
        %s215 = sadd.s32 %s213, %s214
        %s216 = smul.addr %s215, 8
        %s217 = scalar_lea.vmem %s3, %s216
        %s218 = smul.u32 32, %s22
        %v219 = vld [vmem:[%s181] sm:$0xff]
        %v220 = vld [vmem:[%s181 + $0x8] sm:$0xff]
        %v221 = vld [vmem:[%s181 + $0x10] sm:$0xff]
        %v222 = vld [vmem:[%s181 + $0x18] sm:$0xff]
        %v223 = vld [vmem:[%s181 + $0x20] sm:$0xff]
        %v224 = vld [vmem:[%s181 + $0x28] sm:$0xff]
        %v225 = vld [vmem:[%s181 + $0x30] sm:$0xff]
        %v226 = vld [vmem:[%s181 + $0x38] sm:$0xff]
        %v227 = vadd.f32 %v219, %v221
        %v228 = vadd.f32 %v227, %v223
        %v229 = vadd.f32 %v228, %v225
        %v230 = vrot.slane %v229, 4
        %v231 = vadd.f32 %v229, %v230
        %v232 = vrot.slane %v231, 2
        %v233 = vadd.f32 %v231, %v232
        %v234 = vrot.slane %v233, 1
        %v235 = vadd.f32 %v233, %v234
        %v236 = vadd.f32 %v220, %v222
        %v237 = vadd.f32 %v236, %v224
        %v238 = vadd.f32 %v237, %v226
        %v239 = vrot.slane %v238, 4
        %v240 = vadd.f32 %v238, %v239
        %v241 = vrot.slane %v240, 2
        %v242 = vadd.f32 %v240, %v241
        %v243 = vrot.slane %v242, 1
        %v244 = vadd.f32 %v242, %v243
        %v245 = vrcp.pop 32.0
        %v246 = vmul.f32 %v235, %v245
        %v247 = vmul.f32 %v244, %v245
        %v248 = vsub.f32 %v219, %v246
        %v249 = vsub.f32 %v220, %v247
        %v250 = vsub.f32 %v221, %v246
        %v251 = vsub.f32 %v222, %v247
        %v252 = vsub.f32 %v223, %v246
        %v253 = vsub.f32 %v224, %v247
        %v254 = vsub.f32 %v225, %v246
        %v255 = vsub.f32 %v226, %v247
        %v256 = vmul.f32 %v248, %v248
        %v257 = vmul.f32 %v249, %v249
        %v258 = vmul.f32 %v250, %v250
        %v259 = vmul.f32 %v251, %v251
        %v260 = vmul.f32 %v252, %v252
        %v261 = vmul.f32 %v253, %v253
        %v262 = vmul.f32 %v254, %v254
        %v263 = vmul.f32 %v255, %v255
        %v264 = vadd.f32 %v256, %v258
        %v265 = vadd.f32 %v264, %v260
        %v266 = vadd.f32 %v265, %v262
        %v267 = vrot.slane %v266, 4
        %v268 = vadd.f32 %v266, %v267
        %v269 = vrot.slane %v268, 2
        %v270 = vadd.f32 %v268, %v269
        %v271 = vrot.slane %v270, 1
        %v272 = vadd.f32 %v270, %v271
        %v273 = vadd.f32 %v257, %v259
        %v274 = vadd.f32 %v273, %v261
        %v275 = vadd.f32 %v274, %v263
        %v276 = vrot.slane %v275, 4
        %v277 = vadd.f32 %v275, %v276
        %v278 = vrot.slane %v277, 2
        %v279 = vadd.f32 %v277, %v278
        %v280 = vrot.slane %v279, 1
        %v281 = vadd.f32 %v279, %v280
        %v282 = vmul.f32 %v272, %v245
        %v283 = vmul.f32 %v281, %v245
        %v284 = vadd.f32 %v282, 1e-05
        %v285 = vadd.f32 %v283, 1e-05
        %v286 = vrsqrt.pop %v284
        %v287 = vrsqrt.pop %v285
        %v288 = vld [vmem:[%s1] sm:$0xff]
        %v289 = vld [vmem:[%s1 + $0x8] sm:$0xff]
        %v290 = vld [vmem:[%s1 + $0x10] sm:$0xff]
        %v291 = vld [vmem:[%s1 + $0x18] sm:$0xff]
        %v292 = vld [vmem:[%s2] sm:$0xff]
        %v293 = vld [vmem:[%s2 + $0x8] sm:$0xff]
        %v294 = vld [vmem:[%s2 + $0x10] sm:$0xff]
        %v295 = vld [vmem:[%s2 + $0x18] sm:$0xff]
        %v296 = vmul.f32 %v248, %v286
        %v297 = vmul.f32 %v249, %v287
        %v298 = vmul.f32 %v250, %v286
        %v299 = vmul.f32 %v251, %v287
        %v300 = vmul.f32 %v252, %v286
        %v301 = vmul.f32 %v253, %v287
        %v302 = vmul.f32 %v254, %v286
        %v303 = vmul.f32 %v255, %v287
        %305 = vset.pattern.permute.xlu0 0
        %306 = vperm.xlu0 %305, %v288
        %v307 = vpop.permute.xlu0 %306
        %310 = vset.pattern.permute.xlu0 0
        %311 = vperm.xlu0 %310, %v289
        %v312 = vpop.permute.xlu0 %311
        %315 = vset.pattern.permute.xlu0 0
        %316 = vperm.xlu0 %315, %v290
        %v317 = vpop.permute.xlu0 %316
        %320 = vset.pattern.permute.xlu0 0
        %321 = vperm.xlu0 %320, %v291
        %v322 = vpop.permute.xlu0 %321
        %v324 = vmul.f32 %v296, %v307
        %v325 = vmul.f32 %v297, %v307
        %v326 = vmul.f32 %v298, %v312
        %v327 = vmul.f32 %v299, %v312
        %v328 = vmul.f32 %v300, %v317
        %v329 = vmul.f32 %v301, %v317
        %v330 = vmul.f32 %v302, %v322
        %v331 = vmul.f32 %v303, %v322
        %333 = vset.pattern.permute.xlu0 0
        %334 = vperm.xlu0 %333, %v292
        %v335 = vpop.permute.xlu0 %334
        %338 = vset.pattern.permute.xlu0 0
        %339 = vperm.xlu0 %338, %v293
        %v340 = vpop.permute.xlu0 %339
        %343 = vset.pattern.permute.xlu0 0
        %344 = vperm.xlu0 %343, %v294
        %v345 = vpop.permute.xlu0 %344
        %348 = vset.pattern.permute.xlu0 0
        %349 = vperm.xlu0 %348, %v295
        %v350 = vpop.permute.xlu0 %349
        %v352 = vadd.f32 %v324, %v335
        %v353 = vadd.f32 %v325, %v335
        %v354 = vadd.f32 %v326, %v340
        %v355 = vadd.f32 %v327, %v340
        %v356 = vadd.f32 %v328, %v345
        %v357 = vadd.f32 %v329, %v345
        %v358 = vadd.f32 %v330, %v350
        %v359 = vadd.f32 %v331, %v350
        %360 = vxpose.xlu0.b32.start [1/16] %v352, 128
        %361 = vxpose.xlu0.b32.cont [2/16] %v354, 128
        %362 = vxpose.xlu0.b32.cont [3/16] %v356, 128
        %363 = vxpose.xlu0.b32.cont [4/16] %v358, 128
        %364 = vxpose.xlu0.b32.cont [5/16] 0.0, 128
        %365 = vxpose.xlu0.b32.cont [6/16] 0.0, 128
        %366 = vxpose.xlu0.b32.cont [7/16] 0.0, 128
        %367 = vxpose.xlu0.b32.cont [8/16] 0.0, 128
        %368 = vxpose.xlu0.b32.cont [9/16] 0.0, 128
        %369 = vxpose.xlu0.b32.cont [10/16] 0.0, 128
        %370 = vxpose.xlu0.b32.cont [11/16] 0.0, 128
        %371 = vxpose.xlu0.b32.cont [12/16] 0.0, 128
        %372 = vxpose.xlu0.b32.cont [13/16] 0.0, 128
        %373 = vxpose.xlu0.b32.cont [14/16] 0.0, 128
        %374 = vxpose.xlu0.b32.cont [15/16] 0.0, 128
        %375 = vxpose.xlu0.b32.end [16/16] 0.0, 128
        %v376 = vpop.trf.xlu0
        %v377 = vpop.trf.xlu0
        %v378 = vpop.trf.xlu0
        %v379 = vpop.trf.xlu0
        %v380 = vpop.trf.xlu0
        %v381 = vpop.trf.xlu0
        %v382 = vpop.trf.xlu0
        %v383 = vpop.trf.xlu0
        %v384 = vpop.trf.xlu0
        %v385 = vpop.trf.xlu0
        %v386 = vpop.trf.xlu0
        %v387 = vpop.trf.xlu0
        %v388 = vpop.trf.xlu0
        %v389 = vpop.trf.xlu0
        %v390 = vpop.trf.xlu0
        %v391 = vpop.trf.xlu0
        %392 = vxpose.xlu0.b32.start [1/16] %v353, 128
        %393 = vxpose.xlu0.b32.cont [2/16] %v355, 128
        %394 = vxpose.xlu0.b32.cont [3/16] %v357, 128
        %395 = vxpose.xlu0.b32.cont [4/16] %v359, 128
        %396 = vxpose.xlu0.b32.cont [5/16] 0.0, 128
        %397 = vxpose.xlu0.b32.cont [6/16] 0.0, 128
        %398 = vxpose.xlu0.b32.cont [7/16] 0.0, 128
        %399 = vxpose.xlu0.b32.cont [8/16] 0.0, 128
        %400 = vxpose.xlu0.b32.cont [9/16] 0.0, 128
        %401 = vxpose.xlu0.b32.cont [10/16] 0.0, 128
        %402 = vxpose.xlu0.b32.cont [11/16] 0.0, 128
        %403 = vxpose.xlu0.b32.cont [12/16] 0.0, 128
        %404 = vxpose.xlu0.b32.cont [13/16] 0.0, 128
        %405 = vxpose.xlu0.b32.cont [14/16] 0.0, 128
        %406 = vxpose.xlu0.b32.cont [15/16] 0.0, 128
        %407 = vxpose.xlu0.b32.end [16/16] 0.0, 128
        %v408 = vpop.trf.xlu0
        %v409 = vpop.trf.xlu0
        %v410 = vpop.trf.xlu0
        %v411 = vpop.trf.xlu0
        %v412 = vpop.trf.xlu0
        %v413 = vpop.trf.xlu0
        %v414 = vpop.trf.xlu0
        %v415 = vpop.trf.xlu0
        %v416 = vpop.trf.xlu0
        %v417 = vpop.trf.xlu0
        %v418 = vpop.trf.xlu0
        %v419 = vpop.trf.xlu0
        %v420 = vpop.trf.xlu0
        %v421 = vpop.trf.xlu0
        %v422 = vpop.trf.xlu0
        %v423 = vpop.trf.xlu0
        %vm424 = vcmask 261120
        %425 = vst.msk [vmem:[%s217] sm:$0xff] %vm424, %v376
        %426 = vst.msk [vmem:[%s217 + $0x8] sm:$0xff] %vm424, %v377
        %427 = vst.msk [vmem:[%s217 + $0x10] sm:$0xff] %vm424, %v378
        %428 = vst.msk [vmem:[%s217 + $0x18] sm:$0xff] %vm424, %v379
        %429 = vst.msk [vmem:[%s217 + $0x20] sm:$0xff] %vm424, %v380
        %430 = vst.msk [vmem:[%s217 + $0x28] sm:$0xff] %vm424, %v381
        %431 = vst.msk [vmem:[%s217 + $0x30] sm:$0xff] %vm424, %v382
        %432 = vst.msk [vmem:[%s217 + $0x38] sm:$0xff] %vm424, %v383
        %433 = vst.msk [vmem:[%s217 + $0x40] sm:$0xff] %vm424, %v384
        %434 = vst.msk [vmem:[%s217 + $0x48] sm:$0xff] %vm424, %v385
        %435 = vst.msk [vmem:[%s217 + $0x50] sm:$0xff] %vm424, %v386
        %436 = vst.msk [vmem:[%s217 + $0x58] sm:$0xff] %vm424, %v387
        %437 = vst.msk [vmem:[%s217 + $0x60] sm:$0xff] %vm424, %v388
        %438 = vst.msk [vmem:[%s217 + $0x68] sm:$0xff] %vm424, %v389
        %439 = vst.msk [vmem:[%s217 + $0x70] sm:$0xff] %vm424, %v390
        %440 = vst.msk [vmem:[%s217 + $0x78] sm:$0xff] %vm424, %v391
        %441 = vst.msk [vmem:[%s217 + $0x80] sm:$0xff] %vm424, %v408
        %442 = vst.msk [vmem:[%s217 + $0x88] sm:$0xff] %vm424, %v409
        %443 = vst.msk [vmem:[%s217 + $0x90] sm:$0xff] %vm424, %v410
        %444 = vst.msk [vmem:[%s217 + $0x98] sm:$0xff] %vm424, %v411
        %445 = vst.msk [vmem:[%s217 + $0xa0] sm:$0xff] %vm424, %v412
        %446 = vst.msk [vmem:[%s217 + $0xa8] sm:$0xff] %vm424, %v413
        %447 = vst.msk [vmem:[%s217 + $0xb0] sm:$0xff] %vm424, %v414
        %448 = vst.msk [vmem:[%s217 + $0xb8] sm:$0xff] %vm424, %v415
        %449 = vst.msk [vmem:[%s217 + $0xc0] sm:$0xff] %vm424, %v416
        %450 = vst.msk [vmem:[%s217 + $0xc8] sm:$0xff] %vm424, %v417
        %451 = vst.msk [vmem:[%s217 + $0xd0] sm:$0xff] %vm424, %v418
        %452 = vst.msk [vmem:[%s217 + $0xd8] sm:$0xff] %vm424, %v419
        %453 = vst.msk [vmem:[%s217 + $0xe0] sm:$0xff] %vm424, %v420
        %454 = vst.msk [vmem:[%s217 + $0xe8] sm:$0xff] %vm424, %v421
        %455 = vst.msk [vmem:[%s217 + $0xf0] sm:$0xff] %vm424, %v422
        %456 = vst.msk [vmem:[%s217 + $0xf8] sm:$0xff] %vm424, %v423
        %s457 = smul.u32 32, %s22
        %p458 = scmp.lt.s32.totalorder %s21, 1
        %s459 = scalar_select %p458, %s21, 1
        %p460 = scmp.lt.s32.totalorder %s457, 31
        %s461 = scalar_select %p460, %s457, 31
        %s462 = smul.addr %s459, 32
        %s463 = sadd.s32 %s461, %s462
        %s464 = smul.addr %s463, 8
        %s465 = scalar_lea.vmem %s3, %s464
        // Predicated region
        $region37: #{tpu_custom_call.1} parent=31 // pred_check
          %p466 = pneg %p119
        $region38: #{tpu_custom_call.1} parent=31 // pred_check_branch
          %468 = sbr.rel (%p466) target = $region40
        $region39: #{tpu_custom_call.1} parent=31 // pred_region
          %s469 = smul.u32 32, %s22
        $region40: #{tpu_custom_call.1} parent=31 // pred_fallthru
          _
      $region32: #{tpu_custom_call.1} parent=5 // pred_fallthru
        _
      %p470 = scmp.le.s32.totalorder 2, %s12
      // Predicated region
      $region41: #{tpu_custom_call.1} parent=5 // pred_check
        %p471 = pneg %p470
      $region42: #{tpu_custom_call.1} parent=5 // pred_check_branch
        %473 = sbr.rel (%p471) target = $region44
      $region43: #{tpu_custom_call.1} parent=5 // pred_region
        %s474 = ssub.s32 %s12, 2
        // Predicated region
        $region45: #{tpu_custom_call.1} parent=43 // pred_check
          %p475 = pneg %p125
        $region46: #{tpu_custom_call.1} parent=43 // pred_check_branch
          %477 = sbr.rel (%p475) target = $region48
        $region47: #{tpu_custom_call.1} parent=43 // pred_region
          %s478 = smul.u32 32, %s24
          %p479 = scmp.lt.s32.totalorder %s23, 1
          %s480 = scalar_select %p479, %s23, 1
          %p481 = scmp.lt.s32.totalorder %s478, 31
          %s482 = scalar_select %p481, %s478, 31
          %s483 = smul.addr %s480, 32
          %s484 = sadd.s32 %s482, %s483
          %s485 = smul.addr %s484, 8
          %s486 = scalar_lea.vmem %s3, %s485
        $region48: #{tpu_custom_call.1} parent=43 // pred_fallthru
          _
      $region44: #{tpu_custom_call.1} parent=5 // pred_fallthru
        _
    $region6: #{tpu_custom_call.1} parent=1 // loop_footer
      %s16 = sadd.s32 1, %s12
    $region7: #{tpu_custom_call.1} parent=1 // loop_footer_branch
      %11 = sbr.rel target = $region3
    $region8: #{tpu_custom_call.1} parent=1 // loop_exit
      _
    %487 = vsyncpa [#allocation3], 1
    %s488 = scalar_lea.sflag [#allocation3], 1
    %489 = vsyncpa %s488, 1

</llo_original>
